<compile_context>
chip_gen: v5e
topology: v5e:2x2
jax: 0.10.0
libtpu: 0.0.40
codegen_flags: <defaults>
</compile_context>

<pallas_src>
import functools

import jax
import jax.numpy as jnp
from jax.experimental import pallas as pl
from jax.experimental.pallas import tpu as pltpu


def _round_up(x, m):
    return (x + m - 1) // m * m


def _vq_kernel(z_ref, e_ref, et_ref, esq_ref, zq_ref, idx_ref, part_ref,
               *, n_e, hw, tm, needs_mask):
    # z_ref:   (1, C, tm)  input tile, channels on sublanes, spatial on lanes
    # e_ref:   (n_e, C)    codebook (resident across the grid)
    # et_ref:  (C, n_e)    codebook transposed (resident)
    # esq_ref: (n_e, 1)    precomputed ||e_k||^2 (resident)
    z = z_ref[0].astype(jnp.float32)                                    # (C, tm)
    e = e_ref[...].astype(jnp.float32)                                  # (n_e, C)
    e_t = et_ref[...].astype(jnp.float32)                               # (C, n_e)
    e_sq = esq_ref[...]                                                 # (n_e, 1)

    # d[k, j] = ||e_k||^2 - 2 <e_k, z_j>   (||z_j||^2 dropped: argmin-invariant)
    ze = jax.lax.dot_general(e, z, (((1,), (0,)), ((), ())),
                             preferred_element_type=jnp.float32)        # (n_e, tm)
    d = e_sq - 2.0 * ze                                                 # (n_e, tm)

    # first-occurrence argmin over the codebook (sublane) axis == torch.argmin
    d_min = jnp.min(d, axis=0, keepdims=True)                           # (1, tm)
    code_iota = jax.lax.broadcasted_iota(jnp.int32, d.shape, 0)         # (n_e, tm)
    cand = jnp.where(d == d_min, code_iota.astype(jnp.float32), float(n_e))
    idx = jnp.min(cand, axis=0, keepdims=True).astype(jnp.int32)        # (1, tm)
    idx_ref[...] = idx[None, None]                                      # (1,1,1,tm)

    # codebook gather via one-hot matmul (MXU, lane-dense result)
    one_hot = (code_iota == idx).astype(jnp.float32)                    # (n_e, tm)
    zq = jax.lax.dot_general(e_t, one_hot, (((1,), (0,)), ((), ())),
                             preferred_element_type=jnp.float32)        # (C, tm)
    zq_ref[...] = zq[None].astype(zq_ref.dtype)

    # per-tile partial sum of (z_q - z)^2 for the commitment / codebook loss
    sq = (zq - z) ** 2                                                  # (C, tm)
    if needs_mask:  # mask lanes past the true H*W when the spatial dim was padded
        lane = (pl.program_id(1) * tm
                + jax.lax.broadcasted_iota(jnp.int32, (1, tm), 1))
        sq = jnp.where(lane < hw, sq, 0.0)
    part_ref[...] = jnp.broadcast_to(jnp.sum(sq), part_ref.shape)


def _vq_pallas(z_flat, embedding, tm, hw):
    B, C, hw_pad = z_flat.shape
    n_e = embedding.shape[0]
    ntiles = hw_pad // tm

    # hoisted codebook-derived constants (tiny, resident in VMEM)
    e_t = jnp.transpose(embedding)                                      # (C, n_e)
    e_sq = jnp.sum(embedding.astype(jnp.float32) ** 2, axis=1,
                   keepdims=True)                                       # (n_e, 1)

    kernel = functools.partial(_vq_kernel, n_e=n_e, hw=hw, tm=tm,
                               needs_mask=(hw_pad != hw))
    return pl.pallas_call(
        kernel,
        out_shape=(
            jax.ShapeDtypeStruct((B, C, hw_pad), z_flat.dtype),         # z_q
            jax.ShapeDtypeStruct((B, ntiles, 1, tm), jnp.int32),        # indices
            jax.ShapeDtypeStruct((B, ntiles, 1, 128), jnp.float32),     # loss partials
        ),
        grid_spec=pltpu.PrefetchScalarGridSpec(
            num_scalar_prefetch=0,
            grid=(B, ntiles),
            in_specs=[
                pl.BlockSpec((1, C, tm), lambda b, j: (b, 0, j)),
                pl.BlockSpec((n_e, C), lambda b, j: (0, 0)),
                pl.BlockSpec((C, n_e), lambda b, j: (0, 0)),
                pl.BlockSpec((n_e, 1), lambda b, j: (0, 0)),
            ],
            out_specs=[
                pl.BlockSpec((1, C, tm), lambda b, j: (b, 0, j)),
                pl.BlockSpec((1, 1, 1, tm), lambda b, j: (b, j, 0, 0)),
                pl.BlockSpec((1, 1, 1, 128), lambda b, j: (b, j, 0, 0)),
            ],
        ),
        compiler_params=pltpu.CompilerParams(
            # every grid step writes disjoint blocks -> both axes can shard across TCs
            dimension_semantics=("parallel", "parallel"),
            # headroom if tm is raised toward 2048; safe on v5e/v6e (128 MiB) and v7x (64 MiB)
            vmem_limit_bytes=48 * 1024 * 1024,
        ),
    )(z_flat, embedding, e_t, e_sq)


def vector_quantizer2_forward(z_nchw, embedding, beta=0.25, legacy=True,
                              tm_target=1024):
    """Forward pass of VectorQuantizer2 (remap=None, sane_index_shape=False)."""
    B, C, H, W = z_nchw.shape
    n_e, e_dim = embedding.shape
    assert C == e_dim, "channel dim must equal e_dim"
    assert tm_target % 128 == 0

    hw = H * W
    tm = min(tm_target, _round_up(hw, 128))      # big, 128-aligned lane tile
    hw_pad = _round_up(hw, tm)

    # b c h w -> b c (h w): pure reshape, channel-major layout kept (no transposes)
    z_flat = z_nchw.reshape(B, C, hw)            # native dtype, no forced f32 copy
    if hw_pad != hw:
        z_flat = jnp.pad(z_flat, ((0, 0), (0, 0), (0, hw_pad - hw)))

    zq_flat, idx_tiles, partials = _vq_pallas(z_flat, embedding, tm, hw)

    loss_sum = jnp.sum(partials[:, :, 0, 0])
    mse = loss_sum / jnp.float32(B * hw * e_dim)
    if legacy:
        loss = mse + beta * mse    # mean((zq.detach()-z)^2) + beta*mean((zq-z.detach())^2)
    else:
        loss = beta * mse + mse

    # straight-through estimator: z + (z_q - z).detach() == z_q numerically (forward)
    z_q = zq_flat[:, :, :hw].reshape(B, C, H, W)
    min_encoding_indices = idx_tiles.reshape(B, hw_pad)[:, :hw].reshape(-1)

    perplexity = None
    min_encodings = None
    # TODO(synk): remap_to_used (remap != None) and the STE / beta-weighted backward
    # (custom_vjp) are not implemented; module defaults are remap=None, forward-only.
    return z_q, loss, (perplexity, min_encodings, min_encoding_indices)


def _reference_forward(z_nchw, embedding, beta=0.25, legacy=True):
    """Pure-JAX mirror of the PyTorch forward, for validation."""
    B, C, H, W = z_nchw.shape
    z = jnp.transpose(z_nchw, (0, 2, 3, 1))
    zf = z.reshape(-1, C).astype(jnp.float32)
    e = embedding.astype(jnp.float32)
    d = (jnp.sum(zf ** 2, axis=1, keepdims=True) + jnp.sum(e ** 2, axis=1)
         - 2.0 * zf @ e.T)
    idx = jnp.argmin(d, axis=1)
    zq = e[idx].reshape(z.shape)
    mse = jnp.mean((zq - z) ** 2)
    loss = (mse + beta * mse) if legacy else (beta * mse + mse)
    zq = jnp.transpose(zq, (0, 3, 1, 2)).astype(z_nchw.dtype)
    return zq, loss, idx.astype(jnp.int32), d


def _validate(z, embedding, beta, zq_k, loss_k, idx_k):
    B, C, H, W = z.shape
    zq_r, loss_r, idx_r, d_r = _reference_forward(z, embedding, beta=beta)
    rows = jnp.arange(idx_r.shape[0])
    same = idx_k == idx_r
    # The kernel drops the argmin-invariant ||z||^2 term, so on floating-point
    # near-ties it may legitimately pick a different (equidistant) code.
    tie = jnp.abs(d_r[rows, idx_k] - d_r[rows, idx_r]) <= 1e-4
    assert bool(jnp.all(same | tie)), "index mismatch beyond FP-tie tolerance"
    same_bchw = same.reshape(B, H, W)[:, None, :, :]
    zq_ok = jnp.where(same_bchw, jnp.abs(zq_k - zq_r) <= 1e-5, True)
    assert bool(jnp.all(zq_ok)), "z_q mismatch"
    assert bool(jnp.allclose(loss_k, loss_r, rtol=1e-5, atol=1e-6)), "loss mismatch"


if __name__ == "__main__":
    # Module hyperparameters (synthetic, deterministic)
    n_e, e_dim, beta = 128, 8, 0.25
    B, H, W = 2, 16, 16                      # input z: (B, e_dim, H, W) NCHW

    key = jax.random.PRNGKey(0)
    k_emb, k_z, k_z2 = jax.random.split(key, 3)
    # nn.Embedding(n_e, e_dim).weight.data.uniform_(-1/n_e, 1/n_e)
    embedding = jax.random.uniform(k_emb, (n_e, e_dim), jnp.float32,
                                   minval=-1.0 / n_e, maxval=1.0 / n_e)
    z = jax.random.normal(k_z, (B, e_dim, H, W), jnp.float32)

    zq, loss, (_, _, inds) = vector_quantizer2_forward(z, embedding, beta=beta,
                                                       legacy=True)
    jax.block_until_ready((zq, loss, inds))
    assert zq.shape == (B, e_dim, H, W)
    assert inds.shape == (B * H * W,)
    _validate(z, embedding, beta, zq, loss, inds)

    # also exercise the padded-tail path (H*W not a multiple of 128)
    H2, W2 = 15, 15
    z2 = jax.random.normal(k_z2, (B, e_dim, H2, W2), jnp.float32)
    zq2, loss2, (_, _, inds2) = vector_quantizer2_forward(z2, embedding,
                                                          beta=beta, legacy=True)
    jax.block_until_ready((zq2, loss2, inds2))
    assert zq2.shape == (B, e_dim, H2, W2)
    assert inds2.shape == (B * H2 * W2,)
    _validate(z2, embedding, beta, zq2, loss2, inds2)

    print("KERNEL_OK")
</pallas_src>

<mosaic_0001>
module attributes {stable_mosaic.version = 11 : i64} {
  func.func @_vq_kernel(%arg0: i32, %arg1: i32, %arg2: memref<1x8x256xf32, #tpu.memory_space<vmem>>, %arg3: memref<128x8xf32, #tpu.memory_space<vmem>>, %arg4: memref<8x128xf32, #tpu.memory_space<vmem>>, %arg5: memref<128x1xf32, #tpu.memory_space<vmem>>, %arg6: memref<1x8x256xf32, #tpu.memory_space<vmem>>, %arg7: memref<1x1x1x256xi32, #tpu.memory_space<vmem>>, %arg8: memref<1x1x1x128xf32, #tpu.memory_space<vmem>>) attributes {dimension_semantics = [#tpu.dimension_semantics<parallel>, #tpu.dimension_semantics<parallel>], iteration_bounds = array<i64: 2, 1>, scalar_prefetch = 0 : i64, scratch_operands = 0 : i64, tpu.core_type = #tpu.core_type<tc>, window_params = [{transform_indices = @transform_0, window_bounds = array<i64: 1, 8, 256>}, {pipeline_mode = #tpu.pipeline_mode<synchronous>, transform_indices = @transform_1, window_bounds = array<i64: 128, 8>}, {pipeline_mode = #tpu.pipeline_mode<synchronous>, transform_indices = @transform_2, window_bounds = array<i64: 8, 128>}, {pipeline_mode = #tpu.pipeline_mode<synchronous>, transform_indices = @transform_3, window_bounds = array<i64: 128, 1>}, {transform_indices = @transform_4, window_bounds = array<i64: 1, 8, 256>}, {transform_indices = @transform_5, window_bounds = array<i64: 1, 1, 1, 256>}, {transform_indices = @transform_6, window_bounds = array<i64: 1, 1, 1, 128>}]} {
    %c0 = arith.constant 0 : index
    %c0_0 = arith.constant 0 : index
    %c0_1 = arith.constant 0 : index
    %0 = vector.load %arg2[%c0, %c0_0, %c0_1] : memref<1x8x256xf32, #tpu.memory_space<vmem>>, vector<1x8x256xf32>
    %1 = vector.shape_cast %0 : vector<1x8x256xf32> to vector<8x256xf32>
    %c0_2 = arith.constant 0 : index
    %c0_3 = arith.constant 0 : index
    %2 = vector.load %arg3[%c0_2, %c0_3] : memref<128x8xf32, #tpu.memory_space<vmem>>, vector<128x8xf32>
    %c0_4 = arith.constant 0 : index
    %c0_5 = arith.constant 0 : index
    %3 = vector.load %arg4[%c0_4, %c0_5] : memref<8x128xf32, #tpu.memory_space<vmem>>, vector<8x128xf32>
    %c0_6 = arith.constant 0 : index
    %c0_7 = arith.constant 0 : index
    %4 = vector.load %arg5[%c0_6, %c0_7] : memref<128x1xf32, #tpu.memory_space<vmem>>, vector<128x1xf32>
    %cst = arith.constant dense<0.000000e+00> : vector<128x256xf32>
    %5 = tpu.matmul %2, %1, %cst {dimension_numbers = #tpu.dot_dimension_numbers<[1], [0], [0], [1], [0, 0, 1, 1], [], []>} : vector<128x8xf32>, vector<8x256xf32>, vector<128x256xf32> -> vector<128x256xf32>
    %cst_8 = arith.constant 2.000000e+00 : f32
    %6 = vector.broadcast %cst_8 : f32 to vector<128x256xf32>
    %7 = arith.mulf %6, %5 : vector<128x256xf32>
    %8 = vector.broadcast %4 : vector<128x1xf32> to vector<128x256xf32>
    %9 = arith.subf %8, %7 : vector<128x256xf32>
    %cst_9 = arith.constant dense<0x7F800000> : vector<256xf32>
    %10 = vector.multi_reduction <minimumf>, %9, %cst_9 [0] : vector<128x256xf32> to vector<256xf32>
    %11 = vector.shape_cast %10 : vector<256xf32> to vector<1x256xf32>
    %12 = tpu.iota {dimensions = array<i32: 0>} : vector<128x256xi32>
    %13 = vector.broadcast %11 : vector<1x256xf32> to vector<128x256xf32>
    %14 = arith.cmpf oeq, %9, %13 : vector<128x256xf32>
    %15 = arith.sitofp %12 : vector<128x256xi32> to vector<128x256xf32>
    %cst_10 = arith.constant 1.280000e+02 : f32
    %16 = vector.broadcast %cst_10 : f32 to vector<128x256xf32>
    %17 = arith.select %14, %15, %16 : vector<128x256xi1>, vector<128x256xf32>
    %cst_11 = arith.constant dense<0x7F800000> : vector<256xf32>
    %18 = vector.multi_reduction <minimumf>, %17, %cst_11 [0] : vector<128x256xf32> to vector<256xf32>
    %19 = vector.shape_cast %18 : vector<256xf32> to vector<1x256xf32>
    %20 = arith.fptosi %19 : vector<1x256xf32> to vector<1x256xi32>
    %21 = vector.shape_cast %20 : vector<1x256xi32> to vector<1x1x1x256xi32>
    %c0_12 = arith.constant 0 : index
    %c0_13 = arith.constant 0 : index
    %c0_14 = arith.constant 0 : index
    %c0_15 = arith.constant 0 : index
    %22 = vector.load %arg7[%c0_12, %c0_13, %c0_14, %c0_15] : memref<1x1x1x256xi32, #tpu.memory_space<vmem>>, vector<1x1x1x256xi32>
    tpu.vector_store %arg7[%c0_12, %c0_13, %c0_14, %c0_15], %21 {strides = array<i32>} : memref<1x1x1x256xi32, #tpu.memory_space<vmem>>, vector<1x1x1x256xi32>,
    %23 = vector.broadcast %20 : vector<1x256xi32> to vector<128x256xi32>
    %24 = arith.cmpi eq, %12, %23 : vector<128x256xi32>
    %25 = arith.extui %24 : vector<128x256xi1> to vector<128x256xi32>
    %26 = arith.sitofp %25 : vector<128x256xi32> to vector<128x256xf32>
    %cst_16 = arith.constant dense<0.000000e+00> : vector<8x256xf32>
    %27 = tpu.matmul %3, %26, %cst_16 {dimension_numbers = #tpu.dot_dimension_numbers<[1], [0], [0], [1], [0, 0, 1, 1], [], []>} : vector<8x128xf32>, vector<128x256xf32>, vector<8x256xf32> -> vector<8x256xf32>
    %28 = vector.shape_cast %27 : vector<8x256xf32> to vector<1x8x256xf32>
    %c0_17 = arith.constant 0 : index
    %c0_18 = arith.constant 0 : index
    %c0_19 = arith.constant 0 : index
    %29 = vector.load %arg6[%c0_17, %c0_18, %c0_19] : memref<1x8x256xf32, #tpu.memory_space<vmem>>, vector<1x8x256xf32>
    tpu.vector_store %arg6[%c0_17, %c0_18, %c0_19], %28 {strides = array<i32>} : memref<1x8x256xf32, #tpu.memory_space<vmem>>, vector<1x8x256xf32>,
    %30 = arith.subf %27, %1 : vector<8x256xf32>
    %31 = arith.mulf %30, %30 : vector<8x256xf32>
    %32 = vector.shape_cast %31 : vector<8x256xf32> to vector<1x8x256xf32>
    %cst_20 = arith.constant dense<0.000000e+00> : vector<1xf32>
    %33 = vector.multi_reduction <add>, %32, %cst_20 [1, 2] : vector<1x8x256xf32> to vector<1xf32>
    %34 = vector.shape_cast %33 : vector<1xf32> to vector<1x1x1xf32>
    %35 = vector.extract %34[0, 0, 0] : f32 from vector<1x1x1xf32>
    %36 = vector.broadcast %35 : f32 to vector<1x1x1x128xf32>
    %c0_21 = arith.constant 0 : index
    %c0_22 = arith.constant 0 : index
    %c0_23 = arith.constant 0 : index
    %c0_24 = arith.constant 0 : index
    %37 = vector.load %arg8[%c0_21, %c0_22, %c0_23, %c0_24] : memref<1x1x1x128xf32, #tpu.memory_space<vmem>>, vector<1x1x1x128xf32>
    tpu.vector_store %arg8[%c0_21, %c0_22, %c0_23, %c0_24], %36 {strides = array<i32>} : memref<1x1x1x128xf32, #tpu.memory_space<vmem>>, vector<1x1x1x128xf32>,
    return
  }
  func.func @transform_0(%arg0: i32, %arg1: i32) -> (i32, i32, i32) {
    %c0_i32 = arith.constant 0 : i32
    %c0_i32_0 = arith.constant 0 : i32
    return %arg0, %c0_i32, %arg1 : i32, i32, i32
  }
  func.func @transform_1(%arg0: i32, %arg1: i32) -> (i32, i32) {
    %c0_i32 = arith.constant 0 : i32
    %c0_i32_0 = arith.constant 0 : i32
    %c0_i32_1 = arith.constant 0 : i32
    return %c0_i32, %c0_i32_0 : i32, i32
  }
  func.func @transform_2(%arg0: i32, %arg1: i32) -> (i32, i32) {
    %c0_i32 = arith.constant 0 : i32
    %c0_i32_0 = arith.constant 0 : i32
    %c0_i32_1 = arith.constant 0 : i32
    return %c0_i32, %c0_i32_0 : i32, i32
  }
  func.func @transform_3(%arg0: i32, %arg1: i32) -> (i32, i32) {
    %c0_i32 = arith.constant 0 : i32
    %c0_i32_0 = arith.constant 0 : i32
    %c0_i32_1 = arith.constant 0 : i32
    return %c0_i32, %c0_i32_0 : i32, i32
  }
  func.func @transform_4(%arg0: i32, %arg1: i32) -> (i32, i32, i32) {
    %c0_i32 = arith.constant 0 : i32
    %c0_i32_0 = arith.constant 0 : i32
    return %arg0, %c0_i32, %arg1 : i32, i32, i32
  }
  func.func @transform_5(%arg0: i32, %arg1: i32) -> (i32, i32, i32, i32) {
    %c0_i32 = arith.constant 0 : i32
    %c0_i32_0 = arith.constant 0 : i32
    %c0_i32_1 = arith.constant 0 : i32
    return %arg0, %arg1, %c0_i32, %c0_i32_0 : i32, i32, i32, i32
  }
  func.func @transform_6(%arg0: i32, %arg1: i32) -> (i32, i32, i32, i32) {
    %c0_i32 = arith.constant 0 : i32
    %c0_i32_0 = arith.constant 0 : i32
    %c0_i32_1 = arith.constant 0 : i32
    return %arg0, %arg1, %c0_i32, %c0_i32_0 : i32, i32, i32, i32
  }
}

</mosaic_0001>

<llo_original>
// kernel: tpu_custom_call.1
$region0: #{tpu_custom_call.1}
  #allocation0 [shape = 'u32[]', space=smem, size = 0x4, offset = 0x4, fixed_abs, tag = 'smem constant byte address 0x4 - core index']
  #allocation1 [shape = 'u32[72,128]{1,0:T(1,128)}', space=vmem, size = 0x9000, scoped, tag = 'internal scratch']
  %s0 = inlined_call_operand.vmem [shape: f32[2,8,256], index: 0, kind: input, shape index: {}]
  %s1 = inlined_call_operand.vmem [shape: f32[128,8], index: 1, kind: input, shape index: {}]
  %s2 = inlined_call_operand.vmem [shape: f32[8,128], index: 2, kind: input, shape index: {}]
  %s3 = inlined_call_operand.vmem [shape: f32[128,1], index: 3, kind: input, shape index: {}]
  %s4 = inlined_call_operand.hbm [shape: f32[2,8,256], index: 4, kind: output, shape index: {0}]
  %s5 = inlined_call_operand.hbm [shape: s32[2,1,1,256], index: 5, kind: output, shape index: {1}]
  %s6 = inlined_call_operand.hbm [shape: f32[2,1,1,128], index: 6, kind: output, shape index: {2}]
  %7 = xla_tuple %s4, %s5, %s6
  %s8 = sld [smem:[#allocation0]]
  $region65: #{tpu_custom_call.1} parent=0
    _
  %s10 = ssub.s32 1, %s8
  %s11 = scalar_select 0, %s10, %s8
  $region1: #{tpu_custom_call.1} parent=0
    #allocation2 [shape = 'u8[16384]{0}', space=vmem, size = 0x4000, scoped, tag = 'output window, operand 0']
    #allocation3 [shape = 's32[2]{0}', space=sflag, size = 0x8, scoped, tag = 'scoped memory for tpu_custom_call.1']
    #allocation4 [shape = 'u8[2048]{0}', space=vmem, size = 0x800, scoped, tag = 'output window, operand 1']
    #allocation5 [shape = 's32[2]{0}', space=sflag, size = 0x8, scoped, tag = 'scoped memory for tpu_custom_call.1']
    #allocation6 [shape = 'u8[1024]{0}', space=vmem, size = 0x400, scoped, tag = 'output window, operand 2']
    %12 = vsyncpa [#allocation3], 0
    %s13 = scalar_lea.sflag [#allocation3], 1
    %14 = vsyncpa %s13, 0
    %15 = vsyncpa [#allocation5], 0
    %s16 = scalar_lea.sflag [#allocation5], 1
    %17 = vsyncpa %s16, 0
    loop: start=0, step=1, limit=4
    $region2: #{tpu_custom_call.1} parent=1 // loop_pre_header
      _
    $region3: #{tpu_custom_call.1} parent=1 // loop_header
      %s19 = sphi 0, %s23
      %p20 = scmp.ge.s32.totalorder %s19, 4
      %s26 = sphi 0, %s38
      %s27 = sphi 0, %s34
      %s28 = sphi 0, %s26
      %s29 = sphi 0, %s27
      %s30 = sphi 0, %s28
      %s31 = sphi 0, %s29
      %s43 = sphi 0, %s45
      %s46 = sphi 0, %s43
      %s47 = sphi 0, %s46
      %s63 = sphi 0, %s47
      %s67 = sphi 0, %s67
      %s69 = sphi 0, %s67
      %s70 = sphi 0, %s69
      %s84 = sphi 0, %s70
      %s88 = sphi 0, %s88
      %s90 = sphi 0, %s88
      %s91 = sphi 0, %s90
      %s105 = sphi 0, %s91
      %s109 = sphi 0, %s109
      %s111 = sphi 0, %s109
      %s112 = sphi 0, %s111
      %s126 = sphi 0, %s112
      %s134 = sphi 0, %s136
      %s137 = sphi 0, %s134
      %s138 = sphi 0, %s137
      %s154 = sphi 0, %s138
      %s162 = sphi 0, %s164
      %s165 = sphi 0, %s162
      %s166 = sphi 0, %s165
      %s182 = sphi 0, %s166
      %s190 = sphi 0, %s192
      %s193 = sphi 0, %s190
      %s194 = sphi 0, %s193
      %s210 = sphi 0, %s194
    $region4: #{tpu_custom_call.1} parent=1 // loop_header_branch
      %22 = sbr.rel (%p20) target = $region8
    $region5: #{tpu_custom_call.1} parent=1 // loop_body
      %s24 = ssub.s32 %s19, 1
      %s25 = ssub.s32 %s19, 2
      %s32 = sadd.s32 1, %s27
      %p33 = scmp.ge.s32.totalorder %s32, 1
      %s34 = scalar_select %p33, 0, %s32
      %s35 = sadd.s32 1, %s26
      %s36 = scalar_select %p33, %s35, %s26
      %p37 = scmp.ge.s32.totalorder %s36, 2
      %s38 = scalar_select %p37, 0, %s36
      %s39 = ssub.s32 %s26, %s38
      %s40 = ssub.s32 %s27, %s34
      %s41 = sor.u32 %s39, %s40
      %p42 = scmp.eq.s32.totalorder %s41, 0
      %s44 = sadd.s32 %s43, 1
      %s45 = scalar_select %p42, %s43, %s44
      %p48 = pneg %p42
      %p49 = scmp.eq.s32.totalorder %s19, 1
      %p50 = por %p48, %p49
      %p51 = scmp.ne.s32.totalorder %s43, %s46
      %p52 = scmp.eq.s32.totalorder %s19, 0
      %p53 = por %p51, %p52
      %p54 = scmp.ne.s32.totalorder %s43, %s46
      %p55 = scmp.eq.s32.totalorder %s24, 1
      %p56 = por %p54, %p55
      %p57 = scmp.ne.s32.totalorder %s46, %s47
      %p58 = scmp.eq.s32.totalorder %s24, 0
      %p59 = por %p57, %p58
      %p60 = scmp.ne.s32.totalorder %s46, %s47
      %p61 = scmp.eq.s32.totalorder %s25, 1
      %p62 = por %p60, %p61
      %p64 = scmp.ne.s32.totalorder %s47, %s63
      %p65 = scmp.eq.s32.totalorder %s25, 0
      %p66 = por %p64, %p65
      %s68 = sadd.s32 %s67, 1
      %p71 = scmp.eq.s32.totalorder %s19, 1
      %p72 = scmp.ne.s32.totalorder %s67, %s69
      %p73 = scmp.eq.s32.totalorder %s19, 0
      %p74 = por %p72, %p73
      %p75 = scmp.ne.s32.totalorder %s67, %s69
      %p76 = scmp.eq.s32.totalorder %s24, 1
      %p77 = por %p75, %p76
      %p78 = scmp.ne.s32.totalorder %s69, %s70
      %p79 = scmp.eq.s32.totalorder %s24, 0
      %p80 = por %p78, %p79
      %p81 = scmp.ne.s32.totalorder %s69, %s70
      %p82 = scmp.eq.s32.totalorder %s25, 1
      %p83 = por %p81, %p82
      %p85 = scmp.ne.s32.totalorder %s70, %s84
      %p86 = scmp.eq.s32.totalorder %s25, 0
      %p87 = por %p85, %p86
      %s89 = sadd.s32 %s88, 1
      %p92 = scmp.eq.s32.totalorder %s19, 1
      %p93 = scmp.ne.s32.totalorder %s88, %s90
      %p94 = scmp.eq.s32.totalorder %s19, 0
      %p95 = por %p93, %p94
      %p96 = scmp.ne.s32.totalorder %s88, %s90
      %p97 = scmp.eq.s32.totalorder %s24, 1
      %p98 = por %p96, %p97
      %p99 = scmp.ne.s32.totalorder %s90, %s91
      %p100 = scmp.eq.s32.totalorder %s24, 0
      %p101 = por %p99, %p100
      %p102 = scmp.ne.s32.totalorder %s90, %s91
      %p103 = scmp.eq.s32.totalorder %s25, 1
      %p104 = por %p102, %p103
      %p106 = scmp.ne.s32.totalorder %s91, %s105
      %p107 = scmp.eq.s32.totalorder %s25, 0
      %p108 = por %p106, %p107
      %s110 = sadd.s32 %s109, 1
      %p113 = scmp.eq.s32.totalorder %s19, 1
      %p114 = scmp.ne.s32.totalorder %s109, %s111
      %p115 = scmp.eq.s32.totalorder %s19, 0
      %p116 = por %p114, %p115
      %p117 = scmp.ne.s32.totalorder %s109, %s111
      %p118 = scmp.eq.s32.totalorder %s24, 1
      %p119 = por %p117, %p118
      %p120 = scmp.ne.s32.totalorder %s111, %s112
      %p121 = scmp.eq.s32.totalorder %s24, 0
      %p122 = por %p120, %p121
      %p123 = scmp.ne.s32.totalorder %s111, %s112
      %p124 = scmp.eq.s32.totalorder %s25, 1
      %p125 = por %p123, %p124
      %p127 = scmp.ne.s32.totalorder %s112, %s126
      %p128 = scmp.eq.s32.totalorder %s25, 0
      %p129 = por %p127, %p128
      %s130 = ssub.s32 %s26, %s38
      %s131 = ssub.s32 %s27, %s34
      %s132 = sor.u32 %s130, %s131
      %p133 = scmp.eq.s32.totalorder %s132, 0
      %s135 = sadd.s32 %s134, 1
      %s136 = scalar_select %p133, %s134, %s135
      %p139 = pneg %p133
      %p140 = scmp.eq.s32.totalorder %s19, 1
      %p141 = por %p139, %p140
      %p142 = scmp.ne.s32.totalorder %s134, %s137
      %p143 = scmp.eq.s32.totalorder %s19, 0
      %p144 = por %p142, %p143
      %p145 = scmp.ne.s32.totalorder %s134, %s137
      %p146 = scmp.eq.s32.totalorder %s24, 1
      %p147 = por %p145, %p146
      %p148 = scmp.ne.s32.totalorder %s137, %s138
      %p149 = scmp.eq.s32.totalorder %s24, 0
      %p150 = por %p148, %p149
      %p151 = scmp.ne.s32.totalorder %s137, %s138
      %p152 = scmp.eq.s32.totalorder %s25, 1
      %p153 = por %p151, %p152
      %p155 = scmp.ne.s32.totalorder %s138, %s154
      %p156 = scmp.eq.s32.totalorder %s25, 0
      %p157 = por %p155, %p156
      %s158 = ssub.s32 %s26, %s38
      %s159 = ssub.s32 %s27, %s34
      %s160 = sor.u32 %s158, %s159
      %p161 = scmp.eq.s32.totalorder %s160, 0
      %s163 = sadd.s32 %s162, 1
      %s164 = scalar_select %p161, %s162, %s163
      %p167 = pneg %p161
      %p168 = scmp.eq.s32.totalorder %s19, 1
      %p169 = por %p167, %p168
      %p170 = scmp.ne.s32.totalorder %s162, %s165
      %p171 = scmp.eq.s32.totalorder %s19, 0
      %p172 = por %p170, %p171
      %p173 = scmp.ne.s32.totalorder %s162, %s165
      %p174 = scmp.eq.s32.totalorder %s24, 1
      %p175 = por %p173, %p174
      %p176 = scmp.ne.s32.totalorder %s165, %s166
      %p177 = scmp.eq.s32.totalorder %s24, 0
      %p178 = por %p176, %p177
      %p179 = scmp.ne.s32.totalorder %s165, %s166
      %p180 = scmp.eq.s32.totalorder %s25, 1
      %p181 = por %p179, %p180
      %p183 = scmp.ne.s32.totalorder %s166, %s182
      %p184 = scmp.eq.s32.totalorder %s25, 0
      %p185 = por %p183, %p184
      %s186 = ssub.s32 %s26, %s38
      %s187 = ssub.s32 %s27, %s34
      %s188 = sor.u32 %s186, %s187
      %p189 = scmp.eq.s32.totalorder %s188, 0
      %s191 = sadd.s32 %s190, 1
      %s192 = scalar_select %p189, %s190, %s191
      %p195 = pneg %p189
      %p196 = scmp.eq.s32.totalorder %s19, 1
      %p197 = por %p195, %p196
      %p198 = scmp.ne.s32.totalorder %s190, %s193
      %p199 = scmp.eq.s32.totalorder %s19, 0
      %p200 = por %p198, %p199
      %p201 = scmp.ne.s32.totalorder %s190, %s193
      %p202 = scmp.eq.s32.totalorder %s24, 1
      %p203 = por %p201, %p202
      %p204 = scmp.ne.s32.totalorder %s193, %s194
      %p205 = scmp.eq.s32.totalorder %s24, 0
      %p206 = por %p204, %p205
      %p207 = scmp.ne.s32.totalorder %s193, %s194
      %p208 = scmp.eq.s32.totalorder %s25, 1
      %p209 = por %p207, %p208
      %p211 = scmp.ne.s32.totalorder %s194, %s210
      %p212 = scmp.eq.s32.totalorder %s25, 0
      %p213 = por %p211, %p212
      %p214 = scmp.le.s32.totalorder 1, %s19
      %p215 = scmp.lt.s32.totalorder %s19, 3
      %p216 = pnand %p214, %p215
      %p217 = pneg %p216
      // Predicated region
      $region9: #{tpu_custom_call.1} parent=5 // pred_check
        _
      $region10: #{tpu_custom_call.1} parent=5 // pred_check_branch
        %219 = sbr.rel (%p216) target = $region12
      $region11: #{tpu_custom_call.1} parent=5 // pred_region
        %s220 = ssub.s32 %s19, 1
        // Predicated region
        $region13: #{tpu_custom_call.1} parent=11 // pred_check
          %p221 = pneg %p80
        $region14: #{tpu_custom_call.1} parent=11 // pred_check_branch
          %223 = sbr.rel (%p221) target = $region16
        $region15: #{tpu_custom_call.1} parent=11 // pred_region
          _
        $region16: #{tpu_custom_call.1} parent=11 // pred_fallthru
          _
        // Predicated region
        $region17: #{tpu_custom_call.1} parent=11 // pred_check
          %p224 = pneg %p101
        $region18: #{tpu_custom_call.1} parent=11 // pred_check_branch
          %226 = sbr.rel (%p224) target = $region20
        $region19: #{tpu_custom_call.1} parent=11 // pred_region
          _
        $region20: #{tpu_custom_call.1} parent=11 // pred_fallthru
          _
        // Predicated region
        $region21: #{tpu_custom_call.1} parent=11 // pred_check
          %p227 = pneg %p122
        $region22: #{tpu_custom_call.1} parent=11 // pred_check_branch
          %229 = sbr.rel (%p227) target = $region24
        $region23: #{tpu_custom_call.1} parent=11 // pred_region
          _
        $region24: #{tpu_custom_call.1} parent=11 // pred_fallthru
          _
      $region12: #{tpu_custom_call.1} parent=5 // pred_fallthru
        _
      %p230 = scmp.lt.s32.totalorder %s19, 2
      // Predicated region
      $region25: #{tpu_custom_call.1} parent=5 // pred_check
        %p231 = pneg %p230
      $region26: #{tpu_custom_call.1} parent=5 // pred_check_branch
        %233 = sbr.rel (%p231) target = $region28
      $region27: #{tpu_custom_call.1} parent=5 // pred_region
        // Predicated region
        $region29: #{tpu_custom_call.1} parent=27 // pred_check
          %p234 = pneg %p53
        $region30: #{tpu_custom_call.1} parent=27 // pred_check_branch
          %236 = sbr.rel (%p234) target = $region32
        $region31: #{tpu_custom_call.1} parent=27 // pred_region
          %s237 = smul.u32 2, %s27
          %p238 = scmp.lt.s32.totalorder %s26, 1
          %s239 = scalar_select %p238, %s26, 1
          %p240 = scmp.lt.s32.totalorder %s237, 1
          %s241 = scalar_select %p240, %s237, 1
          %s242 = smul.addr %s239, 2
          %s243 = sadd.s32 %s241, %s242
          %s244 = smul.addr %s243, 8
          %s245 = scalar_lea.vmem %s0, %s244
          %s246 = smul.u32 2, %s27
        $region32: #{tpu_custom_call.1} parent=27 // pred_fallthru
          _
      $region28: #{tpu_custom_call.1} parent=5 // pred_fallthru
        _
      %p247 = scmp.le.s32.totalorder 1, %s19
      %p248 = scmp.lt.s32.totalorder %s19, 3
      %p249 = pnand %p247, %p248
      %p250 = pneg %p249
      // Predicated region
      $region33: #{tpu_custom_call.1} parent=5 // pred_check
        _
      $region34: #{tpu_custom_call.1} parent=5 // pred_check_branch
        %252 = sbr.rel (%p249) target = $region36
      $region35: #{tpu_custom_call.1} parent=5 // pred_region
        %s253 = ssub.s32 %s19, 1
        %s254 = smul.u32 2, %s29
        %p255 = scmp.lt.s32.totalorder %s28, 1
        %s256 = scalar_select %p255, %s28, 1
        %p257 = scmp.lt.s32.totalorder %s254, 1
        %s258 = scalar_select %p257, %s254, 1
        %s259 = smul.addr %s256, 2
        %s260 = sadd.s32 %s258, %s259
        %s261 = smul.addr %s260, 8
        %s262 = scalar_lea.vmem %s0, %s261
        %p263 = pneg %p59
        %p264 = pneg %p56
        %p265 = pneg %p80
        %p266 = pneg %p77
        %p267 = pneg %p101
        %p268 = pneg %p98
        %p269 = pneg %p122
        %p270 = pneg %p119
        %p271 = pneg %p150
        %p272 = pneg %p147
        %s273 = sand.u32 %s137, 1
        %s274 = scalar_lea.sflag [#allocation3], %s273
        %s275 = sand.u32 %s137, 1
        %s276 = smul.addr %s275, 16
        %s277 = scalar_lea.vmem [#allocation2], %s276
        %p278 = pneg %p178
        %p279 = pneg %p175
        %s280 = sand.u32 %s24, 1
        %s281 = scalar_lea.sflag [#allocation5], %s280
        %s282 = sand.u32 %s165, 1
        %s283 = smul.addr %s282, 2
        %s284 = scalar_lea.vmem [#allocation4], %s283
        %p285 = pneg %p206
        %p286 = pneg %p203
        %s287 = sand.u32 %s24, 1
        %s288 = scalar_lea.sflag [#allocation5], %s287
        %s289 = sand.u32 %s193, 1
        %s290 = scalar_lea.vmem [#allocation6], %s289
        %s291 = smul.u32 2, %s29
        %p292 = scmp.lt.s32.totalorder %s28, 1
        %s293 = scalar_select %p292, %s28, 1
        %p294 = scmp.lt.s32.totalorder %s291, 1
        %s295 = scalar_select %p294, %s291, 1
        %s296 = smul.addr %s293, 2
        %s297 = sadd.s32 %s295, %s296
        %s298 = smul.addr %s297, 8
        %s299 = scalar_lea.vmem %s0, %s298
        %s300 = smul.u32 2, %s29
        %s301 = smul.u32 2, %s29
        %v302 = vld [vmem:[%s299] sm:$0xff]
        %v303 = vld [vmem:[%s299 + $0x8] sm:$0xff]
        %v304 = vld [vmem:[%s1] sm:$0xff]
        %v305 = vld [vmem:[%s1 + $0x8] sm:$0xff]
        %v306 = vld [vmem:[%s1 + $0x10] sm:$0xff]
        %v307 = vld [vmem:[%s1 + $0x18] sm:$0xff]
        %v308 = vld [vmem:[%s1 + $0x20] sm:$0xff]
        %v309 = vld [vmem:[%s1 + $0x28] sm:$0xff]
        %v310 = vld [vmem:[%s1 + $0x30] sm:$0xff]
        %v311 = vld [vmem:[%s1 + $0x38] sm:$0xff]
        %v312 = vld [vmem:[%s1 + $0x40] sm:$0xff]
        %v313 = vld [vmem:[%s1 + $0x48] sm:$0xff]
        %v314 = vld [vmem:[%s1 + $0x50] sm:$0xff]
        %v315 = vld [vmem:[%s1 + $0x58] sm:$0xff]
        %v316 = vld [vmem:[%s1 + $0x60] sm:$0xff]
        %v317 = vld [vmem:[%s1 + $0x68] sm:$0xff]
        %v318 = vld [vmem:[%s1 + $0x70] sm:$0xff]
        %v319 = vld [vmem:[%s1 + $0x78] sm:$0xff]
        %v320 = vld [vmem:[%s2] sm:$0xff]
        %v321 = vld [vmem:[%s3] sm:$0xff]
        %v322 = vld [vmem:[%s3 + $0x8] sm:$0xff]
        %v323 = vld [vmem:[%s3 + $0x10] sm:$0xff]
        %v324 = vld [vmem:[%s3 + $0x18] sm:$0xff]
        %v325 = vld [vmem:[%s3 + $0x20] sm:$0xff]
        %v326 = vld [vmem:[%s3 + $0x28] sm:$0xff]
        %v327 = vld [vmem:[%s3 + $0x30] sm:$0xff]
        %v328 = vld [vmem:[%s3 + $0x38] sm:$0xff]
        %v329 = vld [vmem:[%s3 + $0x40] sm:$0xff]
        %v330 = vld [vmem:[%s3 + $0x48] sm:$0xff]
        %v331 = vld [vmem:[%s3 + $0x50] sm:$0xff]
        %v332 = vld [vmem:[%s3 + $0x58] sm:$0xff]
        %v333 = vld [vmem:[%s3 + $0x60] sm:$0xff]
        %v334 = vld [vmem:[%s3 + $0x68] sm:$0xff]
        %v335 = vld [vmem:[%s3 + $0x70] sm:$0xff]
        %v336 = vld [vmem:[%s3 + $0x78] sm:$0xff]
        %vm337 = vcmask 64512
        %v339 = vsel %vm337, %v304, 0
        %v342 = vsel %vm337, %v305, 0
        %v345 = vsel %vm337, %v306, 0
        %v348 = vsel %vm337, %v307, 0
        %v351 = vsel %vm337, %v308, 0
        %v354 = vsel %vm337, %v309, 0
        %v357 = vsel %vm337, %v310, 0
        %v360 = vsel %vm337, %v311, 0
        %v363 = vsel %vm337, %v312, 0
        %v366 = vsel %vm337, %v313, 0
        %v369 = vsel %vm337, %v314, 0
        %v372 = vsel %vm337, %v315, 0
        %v375 = vsel %vm337, %v316, 0
        %v378 = vsel %vm337, %v317, 0
        %v381 = vsel %vm337, %v318, 0
        %v384 = vsel %vm337, %v319, 0
        %386 = vmatpush.msra.mxu0 0.0
        %387 = vmatpush.msra.mxu0 0.0
        %388 = vmatpush.msra.mxu0 0.0
        %389 = vmatpush.msra.mxu0 0.0
        %390 = vmatpush.msra.mxu0 0.0
        %391 = vmatpush.msra.mxu0 0.0
        %392 = vmatpush.msra.mxu0 0.0
        %393 = vmatpush.msra.mxu0 0.0
        %394 = vmatpush.msra.mxu0 0.0
        %395 = vmatpush.msra.mxu0 0.0
        %396 = vmatpush.msra.mxu0 0.0
        %397 = vmatpush.msra.mxu0 0.0
        %398 = vmatpush.msra.mxu0 0.0
        %399 = vmatpush.msra.mxu0 0.0
        %400 = vmatpush.msra.mxu0 0.0
        %401 = vmatpush.msra.mxu0 %v302
        %402 = vmatmul.f32.gmra.mxu0 %v339
        %v403 = vpop.f32.mrf.mxu0
        %v404 = vadd.f32 0.0, %v403
        %405 = vmatmul.f32.gmra.mxu0 %v342
        %v406 = vpop.f32.mrf.mxu0
        %v407 = vadd.f32 0.0, %v406
        %408 = vmatmul.f32.gmra.mxu0 %v345
        %v409 = vpop.f32.mrf.mxu0
        %v410 = vadd.f32 0.0, %v409
        %411 = vmatmul.f32.gmra.mxu0 %v348
        %v412 = vpop.f32.mrf.mxu0
        %v413 = vadd.f32 0.0, %v412
        %414 = vmatmul.f32.gmra.mxu0 %v351
        %v415 = vpop.f32.mrf.mxu0
        %v416 = vadd.f32 0.0, %v415
        %417 = vmatmul.f32.gmra.mxu0 %v354
        %v418 = vpop.f32.mrf.mxu0
        %v419 = vadd.f32 0.0, %v418
        %420 = vmatmul.f32.gmra.mxu0 %v357
        %v421 = vpop.f32.mrf.mxu0
        %v422 = vadd.f32 0.0, %v421
        %423 = vmatmul.f32.gmra.mxu0 %v360
        %v424 = vpop.f32.mrf.mxu0
        %v425 = vadd.f32 0.0, %v424
        %426 = vmatmul.f32.gmra.mxu0 %v363
        %v427 = vpop.f32.mrf.mxu0
        %v428 = vadd.f32 0.0, %v427
        %429 = vmatmul.f32.gmra.mxu0 %v366
        %v430 = vpop.f32.mrf.mxu0
        %v431 = vadd.f32 0.0, %v430
        %432 = vmatmul.f32.gmra.mxu0 %v369
        %v433 = vpop.f32.mrf.mxu0
        %v434 = vadd.f32 0.0, %v433
        %435 = vmatmul.f32.gmra.mxu0 %v372
        %v436 = vpop.f32.mrf.mxu0
        %v437 = vadd.f32 0.0, %v436
        %438 = vmatmul.f32.gmra.mxu0 %v375
        %v439 = vpop.f32.mrf.mxu0
        %v440 = vadd.f32 0.0, %v439
        %441 = vmatmul.f32.gmra.mxu0 %v378
        %v442 = vpop.f32.mrf.mxu0
        %v443 = vadd.f32 0.0, %v442
        %444 = vmatmul.f32.gmra.mxu0 %v381
        %v445 = vpop.f32.mrf.mxu0
        %v446 = vadd.f32 0.0, %v445
        %447 = vmatmul.f32.gmra.mxu0 %v384
        %v448 = vpop.f32.mrf.mxu0
        %v449 = vadd.f32 0.0, %v448
        %450 = vdwg.mxu0
        %451 = vmatpush.msra.mxu0 0.0
        %452 = vmatpush.msra.mxu0 0.0
        %453 = vmatpush.msra.mxu0 0.0
        %454 = vmatpush.msra.mxu0 0.0
        %455 = vmatpush.msra.mxu0 0.0
        %456 = vmatpush.msra.mxu0 0.0
        %457 = vmatpush.msra.mxu0 0.0
        %458 = vmatpush.msra.mxu0 0.0
        %459 = vmatpush.msra.mxu0 0.0
        %460 = vmatpush.msra.mxu0 0.0
        %461 = vmatpush.msra.mxu0 0.0
        %462 = vmatpush.msra.mxu0 0.0
        %463 = vmatpush.msra.mxu0 0.0
        %464 = vmatpush.msra.mxu0 0.0
        %465 = vmatpush.msra.mxu0 0.0
        %466 = vmatpush.msra.mxu0 %v303
        %467 = vmatmul.f32.gmra.mxu0 %v339
        %v468 = vpop.f32.mrf.mxu0
        %v469 = vadd.f32 0.0, %v468
        %470 = vmatmul.f32.gmra.mxu0 %v342
        %v471 = vpop.f32.mrf.mxu0
        %v472 = vadd.f32 0.0, %v471
        %473 = vmatmul.f32.gmra.mxu0 %v345
        %v474 = vpop.f32.mrf.mxu0
        %v475 = vadd.f32 0.0, %v474
        %476 = vmatmul.f32.gmra.mxu0 %v348
        %v477 = vpop.f32.mrf.mxu0
        %v478 = vadd.f32 0.0, %v477
        %479 = vmatmul.f32.gmra.mxu0 %v351
        %v480 = vpop.f32.mrf.mxu0
        %v481 = vadd.f32 0.0, %v480
        %482 = vmatmul.f32.gmra.mxu0 %v354
        %v483 = vpop.f32.mrf.mxu0
        %v484 = vadd.f32 0.0, %v483
        %485 = vmatmul.f32.gmra.mxu0 %v357
        %v486 = vpop.f32.mrf.mxu0
        %v487 = vadd.f32 0.0, %v486
        %488 = vmatmul.f32.gmra.mxu0 %v360
        %v489 = vpop.f32.mrf.mxu0
        %v490 = vadd.f32 0.0, %v489
        %491 = vmatmul.f32.gmra.mxu0 %v363
        %v492 = vpop.f32.mrf.mxu0
        %v493 = vadd.f32 0.0, %v492
        %494 = vmatmul.f32.gmra.mxu0 %v366
        %v495 = vpop.f32.mrf.mxu0
        %v496 = vadd.f32 0.0, %v495
        %497 = vmatmul.f32.gmra.mxu0 %v369
        %v498 = vpop.f32.mrf.mxu0
        %v499 = vadd.f32 0.0, %v498
        %500 = vmatmul.f32.gmra.mxu0 %v372
        %v501 = vpop.f32.mrf.mxu0
        %v502 = vadd.f32 0.0, %v501
        %503 = vmatmul.f32.gmra.mxu0 %v375
        %v504 = vpop.f32.mrf.mxu0
        %v505 = vadd.f32 0.0, %v504
        %506 = vmatmul.f32.gmra.mxu0 %v378
        %v507 = vpop.f32.mrf.mxu0
        %v508 = vadd.f32 0.0, %v507
        %509 = vmatmul.f32.gmra.mxu0 %v381
        %v510 = vpop.f32.mrf.mxu0
        %v511 = vadd.f32 0.0, %v510
        %512 = vmatmul.f32.gmra.mxu0 %v384
        %v513 = vpop.f32.mrf.mxu0
        %v514 = vadd.f32 0.0, %v513
        %515 = vdwg.mxu0
        %v516 = vmul.f32 %v404, 2.0
        %v517 = vmul.f32 %v469, 2.0
        %v518 = vmul.f32 %v407, 2.0
        %v519 = vmul.f32 %v472, 2.0
        %v520 = vmul.f32 %v410, 2.0
        %v521 = vmul.f32 %v475, 2.0
        %v522 = vmul.f32 %v413, 2.0
        %v523 = vmul.f32 %v478, 2.0
        %v524 = vmul.f32 %v416, 2.0
        %v525 = vmul.f32 %v481, 2.0
        %v526 = vmul.f32 %v419, 2.0
        %v527 = vmul.f32 %v484, 2.0
        %v528 = vmul.f32 %v422, 2.0
        %v529 = vmul.f32 %v487, 2.0
        %v530 = vmul.f32 %v425, 2.0
        %v531 = vmul.f32 %v490, 2.0
        %v532 = vmul.f32 %v428, 2.0
        %v533 = vmul.f32 %v493, 2.0
        %v534 = vmul.f32 %v431, 2.0
        %v535 = vmul.f32 %v496, 2.0
        %v536 = vmul.f32 %v434, 2.0
        %v537 = vmul.f32 %v499, 2.0
        %v538 = vmul.f32 %v437, 2.0
        %v539 = vmul.f32 %v502, 2.0
        %v540 = vmul.f32 %v440, 2.0
        %v541 = vmul.f32 %v505, 2.0
        %v542 = vmul.f32 %v443, 2.0
        %v543 = vmul.f32 %v508, 2.0
        %v544 = vmul.f32 %v446, 2.0
        %v545 = vmul.f32 %v511, 2.0
        %v546 = vmul.f32 %v449, 2.0
        %v547 = vmul.f32 %v514, 2.0
        %549 = vset.pattern.permute.xlu0 0
        %550 = vperm.xlu0 %549, %v321
        %v551 = vpop.permute.xlu0 %550
        %554 = vset.pattern.permute.xlu0 0
        %555 = vperm.xlu0 %554, %v322
        %v556 = vpop.permute.xlu0 %555
        %559 = vset.pattern.permute.xlu0 0
        %560 = vperm.xlu0 %559, %v323
        %v561 = vpop.permute.xlu0 %560
        %564 = vset.pattern.permute.xlu0 0
        %565 = vperm.xlu0 %564, %v324
        %v566 = vpop.permute.xlu0 %565
        %569 = vset.pattern.permute.xlu0 0
        %570 = vperm.xlu0 %569, %v325
        %v571 = vpop.permute.xlu0 %570
        %574 = vset.pattern.permute.xlu0 0
        %575 = vperm.xlu0 %574, %v326
        %v576 = vpop.permute.xlu0 %575
        %579 = vset.pattern.permute.xlu0 0
        %580 = vperm.xlu0 %579, %v327
        %v581 = vpop.permute.xlu0 %580
        %584 = vset.pattern.permute.xlu0 0
        %585 = vperm.xlu0 %584, %v328
        %v586 = vpop.permute.xlu0 %585
        %589 = vset.pattern.permute.xlu0 0
        %590 = vperm.xlu0 %589, %v329
        %v591 = vpop.permute.xlu0 %590
        %594 = vset.pattern.permute.xlu0 0
        %595 = vperm.xlu0 %594, %v330
        %v596 = vpop.permute.xlu0 %595
        %599 = vset.pattern.permute.xlu0 0
        %600 = vperm.xlu0 %599, %v331
        %v601 = vpop.permute.xlu0 %600
        %604 = vset.pattern.permute.xlu0 0
        %605 = vperm.xlu0 %604, %v332
        %v606 = vpop.permute.xlu0 %605
        %609 = vset.pattern.permute.xlu0 0
        %610 = vperm.xlu0 %609, %v333
        %v611 = vpop.permute.xlu0 %610
        %614 = vset.pattern.permute.xlu0 0
        %615 = vperm.xlu0 %614, %v334
        %v616 = vpop.permute.xlu0 %615
        %619 = vset.pattern.permute.xlu0 0
        %620 = vperm.xlu0 %619, %v335
        %v621 = vpop.permute.xlu0 %620
        %624 = vset.pattern.permute.xlu0 0
        %625 = vperm.xlu0 %624, %v336
        %v626 = vpop.permute.xlu0 %625
        %v628 = vsub.f32 %v551, %v516
        %v629 = vsub.f32 %v551, %v517
        %v630 = vsub.f32 %v556, %v518
        %v631 = vsub.f32 %v556, %v519
        %v632 = vsub.f32 %v561, %v520
        %v633 = vsub.f32 %v561, %v521
        %v634 = vsub.f32 %v566, %v522
        %v635 = vsub.f32 %v566, %v523
        %v636 = vsub.f32 %v571, %v524
        %v637 = vsub.f32 %v571, %v525
        %v638 = vsub.f32 %v576, %v526
        %v639 = vsub.f32 %v576, %v527
        %v640 = vsub.f32 %v581, %v528
        %v641 = vsub.f32 %v581, %v529
        %v642 = vsub.f32 %v586, %v530
        %v643 = vsub.f32 %v586, %v531
        %v644 = vsub.f32 %v591, %v532
        %v645 = vsub.f32 %v591, %v533
        %v646 = vsub.f32 %v596, %v534
        %v647 = vsub.f32 %v596, %v535
        %v648 = vsub.f32 %v601, %v536
        %v649 = vsub.f32 %v601, %v537
        %v650 = vsub.f32 %v606, %v538
        %v651 = vsub.f32 %v606, %v539
        %v652 = vsub.f32 %v611, %v540
        %v653 = vsub.f32 %v611, %v541
        %v654 = vsub.f32 %v616, %v542
        %v655 = vsub.f32 %v616, %v543
        %v656 = vsub.f32 %v621, %v544
        %v657 = vsub.f32 %v621, %v545
        %v658 = vsub.f32 %v626, %v546
        %v659 = vsub.f32 %v626, %v547
        %v660 = vmin.f32 %v628, %v632
        %v661 = vmin.f32 %v630, %v634
        %v662 = vmin.f32 %v660, %v636
        %v663 = vmin.f32 %v661, %v638
        %v664 = vmin.f32 %v662, %v640
        %v665 = vmin.f32 %v663, %v642
        %v666 = vmin.f32 %v664, %v644
        %v667 = vmin.f32 %v665, %v646
        %v668 = vmin.f32 %v666, %v648
        %v669 = vmin.f32 %v667, %v650
        %v670 = vmin.f32 %v668, %v652
        %v671 = vmin.f32 %v669, %v654
        %v672 = vmin.f32 %v670, %v656
        %v673 = vmin.f32 %v671, %v658
        %v674 = vmin.f32 %v672, %v673
        %v675 = vrot.slane %v674, 4
        %v676 = vmin.f32 %v674, %v675
        %v677 = vrot.slane %v676, 2
        %v678 = vmin.f32 %v676, %v677
        %v679 = vrot.slane %v678, 1
        %v680 = vmin.f32 %v678, %v679
        %v681 = vmin.f32 %v629, %v633
        %v682 = vmin.f32 %v631, %v635
        %v683 = vmin.f32 %v681, %v637
        %v684 = vmin.f32 %v682, %v639
        %v685 = vmin.f32 %v683, %v641
        %v686 = vmin.f32 %v684, %v643
        %v687 = vmin.f32 %v685, %v645
        %v688 = vmin.f32 %v686, %v647
        %v689 = vmin.f32 %v687, %v649
        %v690 = vmin.f32 %v688, %v651
        %v691 = vmin.f32 %v689, %v653
        %v692 = vmin.f32 %v690, %v655
        %v693 = vmin.f32 %v691, %v657
        %v694 = vmin.f32 %v692, %v659
        %v695 = vmin.f32 %v693, %v694
        %v696 = vrot.slane %v695, 4
        %v697 = vmin.f32 %v695, %v696
        %v698 = vrot.slane %v697, 2
        %v699 = vmin.f32 %v697, %v698
        %v700 = vrot.slane %v699, 1
        %v701 = vmin.f32 %v699, %v700
        %v702 = vlaneseq
        %v703 = vshrl.u32 %v702, 7
        %v704 = vadd.s32 %v703, 8
        %v705 = vadd.s32 %v703, 16
        %v706 = vadd.s32 %v703, 24
        %v707 = vadd.s32 %v703, 32
        %v708 = vadd.s32 %v703, 40
        %v709 = vadd.s32 %v703, 48
        %v710 = vadd.s32 %v703, 56
        %v711 = vadd.s32 %v703, 64
        %v712 = vadd.s32 %v703, 72
        %v713 = vadd.s32 %v703, 80
        %v714 = vadd.s32 %v703, 88
        %v715 = vadd.s32 %v703, 96
        %v716 = vadd.s32 %v703, 104
        %v717 = vadd.s32 %v703, 112
        %v718 = vadd.s32 %v703, 120
        %vm719 = vcmp.eq.f32.partialorder %v628, %v680
        %vm720 = vcmp.eq.f32.partialorder %v629, %v701
        %vm721 = vcmp.eq.f32.partialorder %v630, %v680
        %vm722 = vcmp.eq.f32.partialorder %v631, %v701
        %vm723 = vcmp.eq.f32.partialorder %v632, %v680
        %vm724 = vcmp.eq.f32.partialorder %v633, %v701
        %vm725 = vcmp.eq.f32.partialorder %v634, %v680
        %vm726 = vcmp.eq.f32.partialorder %v635, %v701
        %vm727 = vcmp.eq.f32.partialorder %v636, %v680
        %vm728 = vcmp.eq.f32.partialorder %v637, %v701
        %vm729 = vcmp.eq.f32.partialorder %v638, %v680
        %vm730 = vcmp.eq.f32.partialorder %v639, %v701
        %vm731 = vcmp.eq.f32.partialorder %v640, %v680
        %vm732 = vcmp.eq.f32.partialorder %v641, %v701
        %vm733 = vcmp.eq.f32.partialorder %v642, %v680
        %vm734 = vcmp.eq.f32.partialorder %v643, %v701
        %vm735 = vcmp.eq.f32.partialorder %v644, %v680
        %vm736 = vcmp.eq.f32.partialorder %v645, %v701
        %vm737 = vcmp.eq.f32.partialorder %v646, %v680
        %vm738 = vcmp.eq.f32.partialorder %v647, %v701
        %vm739 = vcmp.eq.f32.partialorder %v648, %v680
        %vm740 = vcmp.eq.f32.partialorder %v649, %v701
        %vm741 = vcmp.eq.f32.partialorder %v650, %v680
        %vm742 = vcmp.eq.f32.partialorder %v651, %v701
        %vm743 = vcmp.eq.f32.partialorder %v652, %v680
        %vm744 = vcmp.eq.f32.partialorder %v653, %v701
        %vm745 = vcmp.eq.f32.partialorder %v654, %v680
        %vm746 = vcmp.eq.f32.partialorder %v655, %v701
        %vm747 = vcmp.eq.f32.partialorder %v656, %v680
        %vm748 = vcmp.eq.f32.partialorder %v657, %v701
        %vm749 = vcmp.eq.f32.partialorder %v658, %v680
        %vm750 = vcmp.eq.f32.partialorder %v659, %v701
        %v751 = vcvt.s32.f32 %v703
        %v752 = vcvt.s32.f32 %v704
        %v753 = vcvt.s32.f32 %v705
        %v754 = vcvt.s32.f32 %v706
        %v755 = vcvt.s32.f32 %v707
        %v756 = vcvt.s32.f32 %v708
        %v757 = vcvt.s32.f32 %v709
        %v758 = vcvt.s32.f32 %v710
        %v759 = vcvt.s32.f32 %v711
        %v760 = vcvt.s32.f32 %v712
        %v761 = vcvt.s32.f32 %v713
        %v762 = vcvt.s32.f32 %v714
        %v763 = vcvt.s32.f32 %v715
        %v764 = vcvt.s32.f32 %v716
        %v765 = vcvt.s32.f32 %v717
        %v766 = vcvt.s32.f32 %v718
        %v767 = vsel %vm719, %v751, 128.0
        %v768 = vsel %vm720, %v751, 128.0
        %v769 = vsel %vm721, %v752, 128.0
        %v770 = vsel %vm722, %v752, 128.0
        %v771 = vsel %vm723, %v753, 128.0
        %v772 = vsel %vm724, %v753, 128.0
        %v773 = vsel %vm725, %v754, 128.0
        %v774 = vsel %vm726, %v754, 128.0
        %v775 = vsel %vm727, %v755, 128.0
        %v776 = vsel %vm728, %v755, 128.0
        %v777 = vsel %vm729, %v756, 128.0
        %v778 = vsel %vm730, %v756, 128.0
        %v779 = vsel %vm731, %v757, 128.0
        %v780 = vsel %vm732, %v757, 128.0
        %v781 = vsel %vm733, %v758, 128.0
        %v782 = vsel %vm734, %v758, 128.0
        %v783 = vsel %vm735, %v759, 128.0
        %v784 = vsel %vm736, %v759, 128.0
        %v785 = vsel %vm737, %v760, 128.0
        %v786 = vsel %vm738, %v760, 128.0
        %v787 = vsel %vm739, %v761, 128.0
        %v788 = vsel %vm740, %v761, 128.0
        %v789 = vsel %vm741, %v762, 128.0
        %v790 = vsel %vm742, %v762, 128.0
        %v791 = vsel %vm743, %v763, 128.0
        %v792 = vsel %vm744, %v763, 128.0
        %v793 = vsel %vm745, %v764, 128.0
        %v794 = vsel %vm746, %v764, 128.0
        %v795 = vsel %vm747, %v765, 128.0
        %v796 = vsel %vm748, %v765, 128.0
        %v797 = vsel %vm749, %v766, 128.0
        %v798 = vsel %vm750, %v766, 128.0
        %v799 = vmin.f32 %v767, %v771
        %v800 = vmin.f32 %v769, %v773
        %v801 = vmin.f32 %v799, %v775
        %v802 = vmin.f32 %v800, %v777
        %v803 = vmin.f32 %v801, %v779
        %v804 = vmin.f32 %v802, %v781
        %v805 = vmin.f32 %v803, %v783
        %v806 = vmin.f32 %v804, %v785
        %v807 = vmin.f32 %v805, %v787
        %v808 = vmin.f32 %v806, %v789
        %v809 = vmin.f32 %v807, %v791
        %v810 = vmin.f32 %v808, %v793
        %v811 = vmin.f32 %v809, %v795
        %v812 = vmin.f32 %v810, %v797
        %v813 = vmin.f32 %v811, %v812
        %v814 = vrot.slane %v813, 4
        %v815 = vmin.f32 %v813, %v814
        %v816 = vrot.slane %v815, 2
        %v817 = vmin.f32 %v815, %v816
        %v818 = vrot.slane %v817, 1
        %v819 = vmin.f32 %v817, %v818
        %v820 = vmin.f32 %v768, %v772
        %v821 = vmin.f32 %v770, %v774
        %v822 = vmin.f32 %v820, %v776
        %v823 = vmin.f32 %v821, %v778
        %v824 = vmin.f32 %v822, %v780
        %v825 = vmin.f32 %v823, %v782
        %v826 = vmin.f32 %v824, %v784
        %v827 = vmin.f32 %v825, %v786
        %v828 = vmin.f32 %v826, %v788
        %v829 = vmin.f32 %v827, %v790
        %v830 = vmin.f32 %v828, %v792
        %v831 = vmin.f32 %v829, %v794
        %v832 = vmin.f32 %v830, %v796
        %v833 = vmin.f32 %v831, %v798
        %v834 = vmin.f32 %v832, %v833
        %v835 = vrot.slane %v834, 4
        %v836 = vmin.f32 %v834, %v835
        %v837 = vrot.slane %v836, 2
        %v838 = vmin.f32 %v836, %v837
        %v839 = vrot.slane %v838, 1
        %v840 = vmin.f32 %v838, %v839
        %v841 = vcvt.f32.s32.to.zero.pseudo %v819
        %v842 = vcvt.f32.s32.to.zero.pseudo %v840
        %v843 = vrot.slane %v842, 7
        %vm844 = vcmask 1040384
        %v845 = vsel %vm844, %v841, %v843
        %v846 = vlaneseq
        %vm847 = vcmp.ge.s32.totalorder %v846, 0
        %vm848 = vcmp.lt.s32.totalorder %v846, 256
        %vm849 = vmand %vm847, %vm848
        %850 = vst.msk [vmem:[%s284] sm:$0x3] %vm849, %v845
        %vm851 = vcmp.eq.s32.totalorder %v703, %v841
        %vm852 = vcmp.eq.s32.totalorder %v703, %v842
        %vm853 = vcmp.eq.s32.totalorder %v704, %v841
        %vm854 = vcmp.eq.s32.totalorder %v704, %v842
        %vm855 = vcmp.eq.s32.totalorder %v705, %v841
        %vm856 = vcmp.eq.s32.totalorder %v705, %v842
        %vm857 = vcmp.eq.s32.totalorder %v706, %v841
        %vm858 = vcmp.eq.s32.totalorder %v706, %v842
        %vm859 = vcmp.eq.s32.totalorder %v707, %v841
        %vm860 = vcmp.eq.s32.totalorder %v707, %v842
        %vm861 = vcmp.eq.s32.totalorder %v708, %v841
        %vm862 = vcmp.eq.s32.totalorder %v708, %v842
        %vm863 = vcmp.eq.s32.totalorder %v709, %v841
        %vm864 = vcmp.eq.s32.totalorder %v709, %v842
        %vm865 = vcmp.eq.s32.totalorder %v710, %v841
        %vm866 = vcmp.eq.s32.totalorder %v710, %v842
        %vm867 = vcmp.eq.s32.totalorder %v711, %v841
        %vm868 = vcmp.eq.s32.totalorder %v711, %v842
        %vm869 = vcmp.eq.s32.totalorder %v712, %v841
        %vm870 = vcmp.eq.s32.totalorder %v712, %v842
        %vm871 = vcmp.eq.s32.totalorder %v713, %v841
        %vm872 = vcmp.eq.s32.totalorder %v713, %v842
        %vm873 = vcmp.eq.s32.totalorder %v714, %v841
        %vm874 = vcmp.eq.s32.totalorder %v714, %v842
        %vm875 = vcmp.eq.s32.totalorder %v715, %v841
        %vm876 = vcmp.eq.s32.totalorder %v715, %v842
        %vm877 = vcmp.eq.s32.totalorder %v716, %v841
        %vm878 = vcmp.eq.s32.totalorder %v716, %v842
        %vm879 = vcmp.eq.s32.totalorder %v717, %v841
        %vm880 = vcmp.eq.s32.totalorder %v717, %v842
        %vm881 = vcmp.eq.s32.totalorder %v718, %v841
        %vm882 = vcmp.eq.s32.totalorder %v718, %v842
        %v883 = vsel %vm851, 1, 0
        %v884 = vsel %vm852, 1, 0
        %v885 = vsel %vm853, 1, 0
        %v886 = vsel %vm854, 1, 0
        %v887 = vsel %vm855, 1, 0
        %v888 = vsel %vm856, 1, 0
        %v889 = vsel %vm857, 1, 0
        %v890 = vsel %vm858, 1, 0
        %v891 = vsel %vm859, 1, 0
        %v892 = vsel %vm860, 1, 0
        %v893 = vsel %vm861, 1, 0
        %v894 = vsel %vm862, 1, 0
        %v895 = vsel %vm863, 1, 0
        %v896 = vsel %vm864, 1, 0
        %v897 = vsel %vm865, 1, 0
        %v898 = vsel %vm866, 1, 0
        %v899 = vsel %vm867, 1, 0
        %v900 = vsel %vm868, 1, 0
        %v901 = vsel %vm869, 1, 0
        %v902 = vsel %vm870, 1, 0
        %v903 = vsel %vm871, 1, 0
        %v904 = vsel %vm872, 1, 0
        %v905 = vsel %vm873, 1, 0
        %v906 = vsel %vm874, 1, 0
        %v907 = vsel %vm875, 1, 0
        %v908 = vsel %vm876, 1, 0
        %v909 = vsel %vm877, 1, 0
        %v910 = vsel %vm878, 1, 0
        %v911 = vsel %vm879, 1, 0
        %v912 = vsel %vm880, 1, 0
        %v913 = vsel %vm881, 1, 0
        %v914 = vsel %vm882, 1, 0
        %v915 = vcvt.s32.f32 %v883
        %v916 = vcvt.s32.f32 %v884
        %v917 = vcvt.s32.f32 %v885
        %v918 = vcvt.s32.f32 %v886
        %v919 = vcvt.s32.f32 %v887
        %v920 = vcvt.s32.f32 %v888
        %v921 = vcvt.s32.f32 %v889
        %v922 = vcvt.s32.f32 %v890
        %v923 = vcvt.s32.f32 %v891
        %v924 = vcvt.s32.f32 %v892
        %v925 = vcvt.s32.f32 %v893
        %v926 = vcvt.s32.f32 %v894
        %v927 = vcvt.s32.f32 %v895
        %v928 = vcvt.s32.f32 %v896
        %v929 = vcvt.s32.f32 %v897
        %v930 = vcvt.s32.f32 %v898
        %v931 = vcvt.s32.f32 %v899
        %v932 = vcvt.s32.f32 %v900
        %v933 = vcvt.s32.f32 %v901
        %v934 = vcvt.s32.f32 %v902
        %v935 = vcvt.s32.f32 %v903
        %v936 = vcvt.s32.f32 %v904
        %v937 = vcvt.s32.f32 %v905
        %v938 = vcvt.s32.f32 %v906
        %v939 = vcvt.s32.f32 %v907
        %v940 = vcvt.s32.f32 %v908
        %v941 = vcvt.s32.f32 %v909
        %v942 = vcvt.s32.f32 %v910
        %v943 = vcvt.s32.f32 %v911
        %v944 = vcvt.s32.f32 %v912
        %v945 = vcvt.s32.f32 %v913
        %v946 = vcvt.s32.f32 %v914
        %947 = vmatpush.msra.mxu0 %v945
        %948 = vmatpush.msra.mxu0 %v943
        %949 = vmatpush.msra.mxu0 %v941
        %950 = vmatpush.msra.mxu0 %v939
        %951 = vmatpush.msra.mxu0 %v937
        %952 = vmatpush.msra.mxu0 %v935
        %953 = vmatpush.msra.mxu0 %v933
        %954 = vmatpush.msra.mxu0 %v931
        %955 = vmatpush.msra.mxu0 %v929
        %956 = vmatpush.msra.mxu0 %v927
        %957 = vmatpush.msra.mxu0 %v925
        %958 = vmatpush.msra.mxu0 %v923
        %959 = vmatpush.msra.mxu0 %v921
        %960 = vmatpush.msra.mxu0 %v919
        %961 = vmatpush.msra.mxu0 %v917
        %962 = vmatpush.msra.mxu0 %v915
        %963 = vmatmul.f32.gmra.mxu0 %v320
        %v964 = vpop.f32.mrf.mxu0
        %v965 = vadd.f32 0.0, %v964
        %966 = vdwg.mxu0
        %967 = vmatpush.msra.mxu0 %v946
        %968 = vmatpush.msra.mxu0 %v944
        %969 = vmatpush.msra.mxu0 %v942
        %970 = vmatpush.msra.mxu0 %v940
        %971 = vmatpush.msra.mxu0 %v938
        %972 = vmatpush.msra.mxu0 %v936
        %973 = vmatpush.msra.mxu0 %v934
        %974 = vmatpush.msra.mxu0 %v932
        %975 = vmatpush.msra.mxu0 %v930
        %976 = vmatpush.msra.mxu0 %v928
        %977 = vmatpush.msra.mxu0 %v926
        %978 = vmatpush.msra.mxu0 %v924
        %979 = vmatpush.msra.mxu0 %v922
        %980 = vmatpush.msra.mxu0 %v920
        %981 = vmatpush.msra.mxu0 %v918
        %982 = vmatpush.msra.mxu0 %v916
        %983 = vmatmul.f32.gmra.mxu0 %v320
        %v984 = vpop.f32.mrf.mxu0
        %v985 = vadd.f32 0.0, %v984
        %986 = vdwg.mxu0
        %987 = vst [vmem:[%s277] sm:$0xff] %v965
        %988 = vst [vmem:[%s277 + $0x8] sm:$0xff] %v985
        %v989 = vsub.f32 %v965, %v302
        %v990 = vsub.f32 %v985, %v303
        %v991 = vmul.f32 %v989, %v989
        %v992 = vmul.f32 %v990, %v990
        %v993 = vadd.f32 %v991, %v992
        %994 = vadd.xlane.f32.xlu0 %v993
        %v995 = vpop.xlane.xlu0 %994
        %v996 = vrot.slane %v995, 4
        %v997 = vadd.f32 %v995, %v996
        %v998 = vrot.slane %v997, 2
        %v999 = vadd.f32 %v997, %v998
        %v1000 = vrot.slane %v999, 1
        %v1001 = vadd.f32 %v999, %v1000
        %s1002 = vtos %v1001
        %v1003 = vstv %s1002
        %1004 = vst [vmem:[%s290] sm:$0x1] %v1003
        %s1005 = sand.u32 %s137, 1
        %s1006 = scalar_lea.sflag [#allocation3], %s1005
        %s1007 = sand.u32 %s137, 1
        %s1008 = smul.addr %s1007, 16
        %s1009 = scalar_lea.vmem [#allocation2], %s1008
        %s1010 = sand.u32 %s24, 1
        %s1011 = scalar_lea.sflag [#allocation5], %s1010
        %s1012 = sand.u32 %s165, 1
        %s1013 = smul.addr %s1012, 2
        %s1014 = scalar_lea.vmem [#allocation4], %s1013
        %s1015 = sand.u32 %s24, 1
        %s1016 = scalar_lea.sflag [#allocation5], %s1015
        %s1017 = sand.u32 %s193, 1
        %s1018 = scalar_lea.vmem [#allocation6], %s1017
        // Predicated region
        $region37: #{tpu_custom_call.1} parent=35 // pred_check
          %p1019 = pneg %p147
        $region38: #{tpu_custom_call.1} parent=35 // pred_check_branch
          %1021 = sbr.rel (%p1019) target = $region40
        $region39: #{tpu_custom_call.1} parent=35 // pred_region
          %s1022 = smul.u32 2, %s29
          %1024 = vsyncadd %s1006, 0
          %s1025 = smul.addr %s28, 2
          %s1026 = sadd.s32 %s1022, %s1025
          %s1027 = smul.addr %s1026, 8
          %s1028 = scalar_lea.hbm %s4, %s1027
          %s1030 = sshll.u32 %s1009, 4
          %s1031 = int_to_ptr.vmem [resolvable:$true] %s1030
          %s1032 = sshll.u32 %s1028, 4
          %s1033 = int_to_ptr.hbm [resolvable:$true] %s1032
          %1035 = dma.vmem_to_hbm [thread:$0]  %s1031, 256, %s1033, %s1006
        $region40: #{tpu_custom_call.1} parent=35 // pred_fallthru
          _
        // Predicated region
        $region41: #{tpu_custom_call.1} parent=35 // pred_check
          %p1036 = pneg %p175
        $region42: #{tpu_custom_call.1} parent=35 // pred_check_branch
          %1038 = sbr.rel (%p1036) target = $region44
        $region43: #{tpu_custom_call.1} parent=35 // pred_region
          %1040 = vsyncadd %s1011, 0
          %s1041 = smul.addr %s29, 2
          %s1042 = smul.addr %s28, 2
          %s1043 = sadd.s32 %s1041, %s1042
          %s1044 = scalar_lea.hbm %s5, %s1043
          %s1046 = sshll.u32 %s1014, 4
          %s1047 = int_to_ptr.vmem [resolvable:$true] %s1046
          %s1048 = sshll.u32 %s1044, 4
          %s1049 = int_to_ptr.hbm [resolvable:$true] %s1048
          %1051 = dma.vmem_to_hbm [thread:$0]  %s1047, 32, %s1049, %s1011
        $region44: #{tpu_custom_call.1} parent=35 // pred_fallthru
          _
        // Predicated region
        $region45: #{tpu_custom_call.1} parent=35 // pred_check
          %p1052 = pneg %p203
        $region46: #{tpu_custom_call.1} parent=35 // pred_check_branch
          %1054 = sbr.rel (%p1052) target = $region48
        $region47: #{tpu_custom_call.1} parent=35 // pred_region
          %1056 = vsyncadd %s1016, 0
          %s1057 = sadd.s32 %s29, %s28
          %s1058 = scalar_lea.hbm %s6, %s1057
          %s1060 = sshll.u32 %s1018, 4
          %s1061 = int_to_ptr.vmem [resolvable:$true] %s1060
          %s1062 = sshll.u32 %s1058, 4
          %s1063 = int_to_ptr.hbm [resolvable:$true] %s1062
          %1065 = dma.vmem_to_hbm [thread:$0]  %s1061, 16, %s1063, %s1016
        $region48: #{tpu_custom_call.1} parent=35 // pred_fallthru
          _
      $region36: #{tpu_custom_call.1} parent=5 // pred_fallthru
        _
      %p1066 = scmp.le.s32.totalorder 2, %s19
      // Predicated region
      $region49: #{tpu_custom_call.1} parent=5 // pred_check
        %p1067 = pneg %p1066
      $region50: #{tpu_custom_call.1} parent=5 // pred_check_branch
        %1069 = sbr.rel (%p1067) target = $region52
      $region51: #{tpu_custom_call.1} parent=5 // pred_region
        %s1070 = ssub.s32 %s19, 2
        // Predicated region
        $region53: #{tpu_custom_call.1} parent=51 // pred_check
          %p1071 = pneg %p153
        $region54: #{tpu_custom_call.1} parent=51 // pred_check_branch
          %1073 = sbr.rel (%p1071) target = $region56
        $region55: #{tpu_custom_call.1} parent=51 // pred_region
          %s1074 = sand.u32 %s138, 1
          %s1075 = scalar_lea.sflag [#allocation3], %s1074
          %s1076 = sand.u32 %s138, 1
          %s1077 = smul.addr %s1076, 16
          %s1078 = scalar_lea.vmem [#allocation2], %s1077
          %1080 = dma.done %s1075, 256
        $region56: #{tpu_custom_call.1} parent=51 // pred_fallthru
          _
        // Predicated region
        $region57: #{tpu_custom_call.1} parent=51 // pred_check
          %p1081 = pneg %p181
        $region58: #{tpu_custom_call.1} parent=51 // pred_check_branch
          %1083 = sbr.rel (%p1081) target = $region60
        $region59: #{tpu_custom_call.1} parent=51 // pred_region
          %s1084 = sand.u32 %s25, 1
          %s1085 = scalar_lea.sflag [#allocation5], %s1084
          %s1086 = sand.u32 %s166, 1
          %s1087 = smul.addr %s1086, 2
          %s1088 = scalar_lea.vmem [#allocation4], %s1087
          %1090 = dma.done %s1085, 32
        $region60: #{tpu_custom_call.1} parent=51 // pred_fallthru
          _
        // Predicated region
        $region61: #{tpu_custom_call.1} parent=51 // pred_check
          %p1091 = pneg %p209
        $region62: #{tpu_custom_call.1} parent=51 // pred_check_branch
          %1093 = sbr.rel (%p1091) target = $region64
        $region63: #{tpu_custom_call.1} parent=51 // pred_region
          %s1094 = sand.u32 %s25, 1
          %s1095 = scalar_lea.sflag [#allocation5], %s1094
          %s1096 = sand.u32 %s194, 1
          %s1097 = scalar_lea.vmem [#allocation6], %s1096
          %1099 = dma.done %s1095, 16
        $region64: #{tpu_custom_call.1} parent=51 // pred_fallthru
          _
      $region52: #{tpu_custom_call.1} parent=5 // pred_fallthru
        _
    $region6: #{tpu_custom_call.1} parent=1 // loop_footer
      %s23 = sadd.s32 1, %s19
    $region7: #{tpu_custom_call.1} parent=1 // loop_footer_branch
      %18 = sbr.rel target = $region3
    $region8: #{tpu_custom_call.1} parent=1 // loop_exit
      _
    %1100 = vsyncpa [#allocation3], 1
    %s1101 = scalar_lea.sflag [#allocation3], 1
    %1102 = vsyncpa %s1101, 1
    %1103 = vsyncpa [#allocation5], 1
    %s1104 = scalar_lea.sflag [#allocation5], 1
    %1105 = vsyncpa %s1104, 1

</llo_original>
